<compile_context>
chip_gen: v7x
topology: tpu7x:2x2x1
jax: 0.10.0
libtpu: 0.0.40
codegen_flags: <defaults>
</compile_context>

<pallas_src>
import jax
import jax.numpy as jnp
from jax.experimental import pallas as pl
from jax.experimental.pallas import tpu as pltpu

C_IN = 12        # Sentinel-2 bands used by marinedebrisdetector models
C_HID = 32
THRESHOLD = 0.5  # synthetic stand-in for model.threshold
N_TTA = 6
N_GROUPS = 4     # identity (carries fliplr + flipud too) + 3 rotations
K = 9 * C_IN     # 108 im2col rows
K_PAD = 128      # 108 taps + 1 ones-row (b1) + zero pad -> MXU/sublane aligned


# ----------------------------------------------------------------------------
# Fused kernel: one matmul per sample covering all 6 TTA variants, VPU/XLU
# 1x1 reduction, TTA mean, sigmoid.
# ----------------------------------------------------------------------------
def _fused_kernel(patches_ref, w_ref, w2_ref, b2_ref, out_ref):
    # patches_ref: (1, K_PAD, 4*HW) bf16, lanes = [id | rot1 | rot2 | rot3]
    # w_ref      : (2*C_HID, K_PAD) bf16; rows 0..31 = w1 (b1 folded via the
    #              ones-row), rows 32..63 = channel-flipped w1 (fliplr branch)
    # w2_ref     : (2*C_HID, 1) f32 1x1-conv weights (stacked twice)
    # b2_ref     : (1, 1) f32 scalar in SMEM
    # out_ref    : (1, 1, HW) f32
    hw = out_ref.shape[-1]

    # Single big MXU matmul: (64, 128) x (128, 4*HW), f32 accumulation.
    hidden = jnp.dot(w_ref[...], patches_ref[0],
                     preferred_element_type=jnp.float32)          # (64, 4*HW)

    # 1x1 conv as VPU multiply + XLU sublane reduction (no M=1 matmul).
    act = jnp.maximum(hidden, 0.0) * w2_ref[...]                  # (64, 4*HW)
    top = jnp.sum(act[:C_HID], axis=0, keepdims=True)             # (1, 4*HW)
    bot = jnp.sum(act[C_HID:], axis=0, keepdims=True)             # (1, 4*HW)

    # TTA accumulation, all lane-aligned static slices:
    #   identity counts twice (torch.flipud == batch flip == identity branch),
    #   fliplr = bottom weight half on the identity lane chunk,
    #   rotations = top weight half on their own lane chunks.
    logits = (2.0 * top[:, 0:hw] + bot[:, 0:hw]
              + top[:, hw:2 * hw]
              + top[:, 2 * hw:3 * hw]
              + top[:, 3 * hw:4 * hw])                            # (1, HW)

    # /6 mean; b2 is shared by all variants so add it once. Exact sigmoid
    # divide (no approx reciprocal) to keep thresholding stable.
    s = logits * (1.0 / N_TTA) + b2_ref[0, 0]
    out_ref[...] = (1.0 / (1.0 + jnp.exp(-s)))[None]


# ----------------------------------------------------------------------------
# Wrapper-side im2col + TTA plumbing (tiny XLA ops at this problem size)
# ----------------------------------------------------------------------------
def _im2col_nhwc(x_nchw):
    """x (N,C,H,W) -> zero-padded 3x3 patches (N, H, W, 9*C), tap-major on the
    last axis (matches w1.reshape(9*C_IN, C_HID) row ordering)."""
    N, C, H, W = x_nchw.shape
    xp = jnp.pad(jnp.transpose(x_nchw, (0, 2, 3, 1)),
                 ((0, 0), (1, 1), (1, 1), (0, 0)))
    taps = [xp[:, dy:dy + H, dx:dx + W, :]
            for dy in range(3) for dx in range(3)]
    return jnp.concatenate(taps, axis=-1)


def _build_patch_groups(x):
    """Identity + the 3 rotation TTA groups, with each rotation group's
    inverse output rotation pre-applied so every row aligns with the original
    output pixel and the kernel just adds lane chunks.  (Requires H == W,
    same as the torch TTA wrapper.)"""
    groups = [_im2col_nhwc(x)]
    for rot in (1, 2, 3):
        p = _im2col_nhwc(jnp.rot90(x, k=rot, axes=(2, 3)))
        groups.append(jnp.rot90(p, k=-rot, axes=(1, 2)))
    return jnp.stack(groups, axis=1)             # (N, 4, H, W, 9C)


def marine_debris_detector(x, params):
    """MarineDebrisDetector.forward (non-ensemble + TTA):
       y_score = sigmoid(TTA(model)(X)); y_pred = y_score > threshold."""
    w1, b1, w2, b2 = params
    N, C, H, W = x.shape
    HW = H * W
    L = N_GROUPS * HW

    # Patches: (N, K_PAD, 4*HW) bf16; row 108 = ones (folds b1), rows 109..127 = 0.
    g = _build_patch_groups(x).reshape(N, L, K)
    g = jnp.transpose(g, (0, 2, 1))                               # (N, K, L)
    ones_row = jnp.ones((N, 1, L), g.dtype)
    zero_pad = jnp.zeros((N, K_PAD - K - 1, L), g.dtype)
    patches = jnp.concatenate([g, ones_row, zero_pad],
                              axis=1).astype(jnp.bfloat16)

    # Stacked weights (64, K_PAD): top half = w1, bottom half = channel-flipped
    # w1 (the torch.fliplr TTA branch); b1 folded at column K for both halves.
    def pack(w_mat):
        return jnp.concatenate(
            [w_mat.T, b1.reshape(C_HID, 1),
             jnp.zeros((C_HID, K_PAD - K - 1), w_mat.dtype)], axis=1)

    w1_mat = w1.reshape(K, C_HID)
    w1_fl_mat = jnp.flip(w1, axis=1).reshape(K, C_HID)
    w_stack = jnp.concatenate([pack(w1_mat), pack(w1_fl_mat)],
                              axis=0).astype(jnp.bfloat16)        # (64, 128)
    w2_col = jnp.concatenate([w2.reshape(C_HID, 1)] * 2,
                             axis=0).astype(jnp.float32)          # (64, 1)
    b2_sc = b2.reshape(1, 1).astype(jnp.float32)

    flat = pl.pallas_call(
        _fused_kernel,
        out_shape=jax.ShapeDtypeStruct((N, 1, HW), jnp.float32),
        grid_spec=pltpu.PrefetchScalarGridSpec(
            num_scalar_prefetch=0,
            grid=(N,),                                            # batch only
            in_specs=[
                pl.BlockSpec((1, K_PAD, L), lambda n: (n, 0, 0)),
                pl.BlockSpec((2 * C_HID, K_PAD), lambda n: (0, 0)),
                pl.BlockSpec((2 * C_HID, 1), lambda n: (0, 0)),
                pl.BlockSpec(memory_space=pltpu.MemorySpace.SMEM),
            ],
            out_specs=pl.BlockSpec((1, 1, HW), lambda n: (n, 0, 0)),
        ),
        compiler_params=pltpu.CompilerParams(
            dimension_semantics=("parallel",)),
    )(patches, w_stack, w2_col, b2_sc)

    y_score = flat.reshape(N, 1, H, W)                            # NCHW, 1 ch
    y_pred = y_score > THRESHOLD
    return y_score, y_pred


# ----------------------------------------------------------------------------
# Pure-JAX reference mirroring the torch TTA wrapper literally (f32).
# ----------------------------------------------------------------------------
def _ref_forward(x, params):
    w1, b1, w2, b2 = params

    def model(xi):
        p = _im2col_nhwc(xi)                                      # (N,H,W,9C)
        h = jnp.maximum(
            jnp.einsum('nhwk,ko->nhwo', p, w1.reshape(K, C_HID))
            + b1.reshape(1, 1, 1, C_HID), 0.0)
        logit = (jnp.einsum('nhwo,o->nhw', h, w2.reshape(C_HID))
                 + b2.reshape(()))
        return logit[:, None]                                     # (N,1,H,W)

    y = model(x)
    # torch.fliplr on NCHW flips channels; output fliplr is a 1-channel no-op.
    y = y + model(jnp.flip(x, axis=1))
    # torch.flipud flips the batch dim.
    y = y + jnp.flip(model(jnp.flip(x, axis=0)), axis=0)
    for rot in (1, 2, 3):
        y = y + jnp.rot90(model(jnp.rot90(x, rot, axes=(2, 3))),
                          -rot, axes=(2, 3))
    return jax.nn.sigmoid(y / 6.0)


if __name__ == "__main__":
    key = jax.random.PRNGKey(0)
    k1, k2, k3, k4, kx = jax.random.split(key, 5)

    # Deterministic synthetic parameters (shapes implied by the conv head).
    w1 = jax.random.normal(k1, (9, C_IN, C_HID), jnp.float32) * (
        1.0 / jnp.sqrt(9.0 * C_IN))
    b1 = 0.01 * jax.random.normal(k2, (1, C_HID), jnp.float32)
    w2 = jax.random.normal(k3, (1, C_HID), jnp.float32) * (
        1.0 / jnp.sqrt(float(C_HID)))
    b2 = 0.01 * jax.random.normal(k4, (1, 1), jnp.float32)
    params = (w1, b1, w2, b2)

    # NCHW input like the torch module: batch=2, 12 Sentinel-2 bands, 16x16.
    x = jax.random.normal(kx, (2, C_IN, 16, 16), jnp.float32)

    y_score, y_pred = jax.jit(marine_debris_detector)(x, params)
    jax.block_until_ready((y_score, y_pred))

    assert y_score.shape == (2, 1, 16, 16)
    assert y_pred.shape == (2, 1, 16, 16)
    assert y_pred.dtype == jnp.bool_
    assert bool(jnp.all(jnp.isfinite(y_score)))
    assert bool(jnp.all((y_score >= 0.0) & (y_score <= 1.0)))

    # Correctness vs. the literal f32 TTA reference (bf16 MXU tolerance).
    y_ref = _ref_forward(x, params)
    assert bool(jnp.allclose(y_score, y_ref, atol=2e-2)), (
        float(jnp.max(jnp.abs(y_score - y_ref))))

    print("KERNEL_OK")
</pallas_src>

<mosaic_0001>
module attributes {stable_mosaic.version = 11 : i64} {
  func.func @_fused_kernel(%arg0: i32, %arg1: memref<1x128x1024xbf16, #tpu.memory_space<vmem>>, %arg2: memref<64x128xbf16, #tpu.memory_space<vmem>>, %arg3: memref<64x1xf32, #tpu.memory_space<vmem>>, %arg4: memref<1x1xf32, #tpu.memory_space<smem>>, %arg5: memref<1x1x256xf32, #tpu.memory_space<vmem>>) attributes {dimension_semantics = [#tpu.dimension_semantics<parallel>], iteration_bounds = array<i64: 2>, scalar_prefetch = 0 : i64, scratch_operands = 0 : i64, tpu.core_type = #tpu.core_type<tc>, window_params = [{transform_indices = @transform_0, window_bounds = array<i64: 1, 128, 1024>}, {pipeline_mode = #tpu.pipeline_mode<synchronous>, transform_indices = @transform_1, window_bounds = array<i64: 64, 128>}, {pipeline_mode = #tpu.pipeline_mode<synchronous>, transform_indices = @transform_2, window_bounds = array<i64: 64, 1>}, {transform_indices = @transform_3, window_bounds = array<i64: 1, 1>}, {transform_indices = @transform_4, window_bounds = array<i64: 1, 1, 256>}]} {
    %c0 = arith.constant 0 : index
    %c0_0 = arith.constant 0 : index
    %0 = vector.load %arg2[%c0, %c0_0] : memref<64x128xbf16, #tpu.memory_space<vmem>>, vector<64x128xbf16>
    %c0_1 = arith.constant 0 : index
    %c0_2 = arith.constant 0 : index
    %c0_3 = arith.constant 0 : index
    %1 = vector.load %arg1[%c0_1, %c0_2, %c0_3] : memref<1x128x1024xbf16, #tpu.memory_space<vmem>>, vector<1x128x1024xbf16>
    %2 = vector.shape_cast %1 : vector<1x128x1024xbf16> to vector<128x1024xbf16>
    %cst = arith.constant dense<0.000000e+00> : vector<64x1024xf32>
    %3 = tpu.matmul %0, %2, %cst {dimension_numbers = #tpu.dot_dimension_numbers<[1], [0], [0], [1], [0, 0, 1, 1], [], []>} : vector<64x128xbf16>, vector<128x1024xbf16>, vector<64x1024xf32> -> vector<64x1024xf32>
    %cst_4 = arith.constant 0.000000e+00 : f32
    %4 = vector.broadcast %cst_4 : f32 to vector<64x1024xf32>
    %5 = arith.maximumf %3, %4 : vector<64x1024xf32>
    %c0_5 = arith.constant 0 : index
    %c0_6 = arith.constant 0 : index
    %6 = vector.load %arg3[%c0_5, %c0_6] : memref<64x1xf32, #tpu.memory_space<vmem>>, vector<64x1xf32>
    %7 = vector.broadcast %6 : vector<64x1xf32> to vector<64x1024xf32>
    %8 = arith.mulf %5, %7 : vector<64x1024xf32>
    %9 = vector.extract_strided_slice %8 {offsets = [0, 0], sizes = [32, 1024], strides = [1, 1]} : vector<64x1024xf32> to vector<32x1024xf32>
    %cst_7 = arith.constant dense<0.000000e+00> : vector<1024xf32>
    %10 = vector.multi_reduction <add>, %9, %cst_7 [0] : vector<32x1024xf32> to vector<1024xf32>
    %11 = vector.shape_cast %10 : vector<1024xf32> to vector<1x1024xf32>
    %12 = vector.extract_strided_slice %8 {offsets = [32, 0], sizes = [32, 1024], strides = [1, 1]} : vector<64x1024xf32> to vector<32x1024xf32>
    %cst_8 = arith.constant dense<0.000000e+00> : vector<1024xf32>
    %13 = vector.multi_reduction <add>, %12, %cst_8 [0] : vector<32x1024xf32> to vector<1024xf32>
    %14 = vector.shape_cast %13 : vector<1024xf32> to vector<1x1024xf32>
    %15 = vector.extract_strided_slice %11 {offsets = [0, 0], sizes = [1, 256], strides = [1, 1]} : vector<1x1024xf32> to vector<1x256xf32>
    %cst_9 = arith.constant 2.000000e+00 : f32
    %16 = vector.broadcast %cst_9 : f32 to vector<1x256xf32>
    %17 = arith.mulf %16, %15 : vector<1x256xf32>
    %18 = vector.extract_strided_slice %14 {offsets = [0, 0], sizes = [1, 256], strides = [1, 1]} : vector<1x1024xf32> to vector<1x256xf32>
    %19 = arith.addf %17, %18 : vector<1x256xf32>
    %20 = vector.extract_strided_slice %11 {offsets = [0, 256], sizes = [1, 256], strides = [1, 1]} : vector<1x1024xf32> to vector<1x256xf32>
    %21 = arith.addf %19, %20 : vector<1x256xf32>
    %22 = vector.extract_strided_slice %11 {offsets = [0, 512], sizes = [1, 256], strides = [1, 1]} : vector<1x1024xf32> to vector<1x256xf32>
    %23 = arith.addf %21, %22 : vector<1x256xf32>
    %24 = vector.extract_strided_slice %11 {offsets = [0, 768], sizes = [1, 256], strides = [1, 1]} : vector<1x1024xf32> to vector<1x256xf32>
    %25 = arith.addf %23, %24 : vector<1x256xf32>
    %cst_10 = arith.constant 0.166666672 : f32
    %26 = vector.broadcast %cst_10 : f32 to vector<1x256xf32>
    %27 = arith.mulf %25, %26 : vector<1x256xf32>
    %c0_11 = arith.constant 0 : index
    %c0_12 = arith.constant 0 : index
    %28 = memref.load %arg4[%c0_11, %c0_12] : memref<1x1xf32, #tpu.memory_space<smem>>
    %29 = vector.broadcast %28 : f32 to vector<1x256xf32>
    %30 = arith.addf %27, %29 : vector<1x256xf32>
    %cst_13 = arith.constant 0.000000e+00 : f32
    %31 = vector.broadcast %cst_13 : f32 to vector<1x256xf32>
    %32 = arith.subf %31, %30 : vector<1x256xf32>
    %33 = math.exp %32 : vector<1x256xf32>
    %cst_14 = arith.constant 1.000000e+00 : f32
    %34 = vector.broadcast %cst_14 : f32 to vector<1x256xf32>
    %35 = arith.addf %34, %33 : vector<1x256xf32>
    %cst_15 = arith.constant 1.000000e+00 : f32
    %36 = vector.broadcast %cst_15 : f32 to vector<1x256xf32>
    %37 = arith.divf %36, %35 : vector<1x256xf32>
    %38 = vector.shape_cast %37 : vector<1x256xf32> to vector<1x1x256xf32>
    %c0_16 = arith.constant 0 : index
    %c0_17 = arith.constant 0 : index
    %c0_18 = arith.constant 0 : index
    %39 = vector.load %arg5[%c0_16, %c0_17, %c0_18] : memref<1x1x256xf32, #tpu.memory_space<vmem>>, vector<1x1x256xf32>
    tpu.vector_store %arg5[%c0_16, %c0_17, %c0_18], %38 {strides = array<i32>} : memref<1x1x256xf32, #tpu.memory_space<vmem>>, vector<1x1x256xf32>,
    return
  }
  func.func @transform_0(%arg0: i32) -> (i32, i32, i32) {
    %c0_i32 = arith.constant 0 : i32
    %c0_i32_0 = arith.constant 0 : i32
    %c0_i32_1 = arith.constant 0 : i32
    return %arg0, %c0_i32, %c0_i32_0 : i32, i32, i32
  }
  func.func @transform_1(%arg0: i32) -> (i32, i32) {
    %c0_i32 = arith.constant 0 : i32
    %c0_i32_0 = arith.constant 0 : i32
    %c0_i32_1 = arith.constant 0 : i32
    return %c0_i32, %c0_i32_0 : i32, i32
  }
  func.func @transform_2(%arg0: i32) -> (i32, i32) {
    %c0_i32 = arith.constant 0 : i32
    %c0_i32_0 = arith.constant 0 : i32
    %c0_i32_1 = arith.constant 0 : i32
    return %c0_i32, %c0_i32_0 : i32, i32
  }
  func.func @transform_3(%arg0: i32) -> (i32, i32) {
    %c0_i32 = arith.constant 0 : i32
    %c0_i32_0 = arith.constant 0 : i32
    %c0_i32_1 = arith.constant 0 : i32
    return %c0_i32, %c0_i32_0 : i32, i32
  }
  func.func @transform_4(%arg0: i32) -> (i32, i32, i32) {
    %c0_i32 = arith.constant 0 : i32
    %c0_i32_0 = arith.constant 0 : i32
    %c0_i32_1 = arith.constant 0 : i32
    return %arg0, %c0_i32, %c0_i32_0 : i32, i32, i32
  }
}

</mosaic_0001>

<llo_original>
// kernel: marine_debris_detector.1
$region0: #{marine_debris_detector.1}
  #allocation0 [shape = 'u32[]', space=smem, size = 0x4, offset = 0x4, fixed_abs, tag = 'smem constant byte address 0x4 - core index']
  #allocation1 [shape = 'u32[144,128]{1,0:T(1,128)}', space=vmem, size = 0x12000, scoped, tag = 'internal scratch']
  #allocation2 [shape = 'f32[1,1]{1,0:T(1,128)S(6)}', space=smem, size = 0x200, scoped, tag = 'scoped memory for marine_debris_detector.1']
  %s0 = inlined_call_operand.vmem [shape: bf16[2,128,1024], index: 0, kind: input, shape index: {}]
  %s1 = inlined_call_operand.vmem [shape: bf16[64,128], index: 1, kind: input, shape index: {}]
  %s2 = inlined_call_operand.vmem [shape: f32[64,1], index: 2, kind: input, shape index: {}]
  %s3 = inlined_call_operand.<no memory space> [shape: f32[1,1], index: 3, kind: input, shape index: {}]
  %s4 = inlined_call_operand.vmem [shape: f32[2,1,256], index: 4, kind: output, shape index: {}]
  %s5 = sld [smem:[#allocation0]]
  $region49: #{marine_debris_detector.1} parent=0
    _
  %s7 = ssub.s32 1, %s5
  %s8 = scalar_select 0, %s7, %s5
  %9 = sst [smem:[#allocation2]] %s3
  loop: start=0, step=1, limit=4
  $region2: #{marine_debris_detector.1} parent=0 // loop_pre_header
    _
  $region3: #{marine_debris_detector.1} parent=0 // loop_header
    %s11 = sphi 0, %s15
    %p12 = scmp.ge.s32.totalorder %s11, 4
    %s21 = sphi 0, %s23
    %s24 = sphi 0, %s21
    %s25 = sphi 0, %s24
    %s41 = sphi 0, %s25
    %s45 = sphi 0, %s45
    %s47 = sphi 0, %s45
    %s48 = sphi 0, %s47
    %s62 = sphi 0, %s48
    %s66 = sphi 0, %s66
    %s68 = sphi 0, %s66
    %s69 = sphi 0, %s68
    %s83 = sphi 0, %s69
    %s87 = sphi 0, %s87
    %s89 = sphi 0, %s87
    %s90 = sphi 0, %s89
    %s104 = sphi 0, %s90
    %s110 = sphi 0, %s112
    %s113 = sphi 0, %s110
    %s114 = sphi 0, %s113
    %s130 = sphi 0, %s114
  $region4: #{marine_debris_detector.1} parent=0 // loop_header_branch
    %14 = sbr.rel (%p12) target = $region8
  $region5: #{marine_debris_detector.1} parent=0 // loop_body
    %s16 = ssub.s32 %s11, 1
    %s17 = ssub.s32 %s11, 2
    %s18 = sadd.s32 %s11, 1
    %s19 = ssub.s32 %s11, %s18
    %p20 = scmp.eq.s32.totalorder %s19, 0
    %s22 = sadd.s32 %s21, 1
    %s23 = scalar_select %p20, %s21, %s22
    %p26 = pneg %p20
    %p27 = scmp.eq.s32.totalorder %s11, 1
    %p28 = por %p26, %p27
    %p29 = scmp.ne.s32.totalorder %s21, %s24
    %p30 = scmp.eq.s32.totalorder %s11, 0
    %p31 = por %p29, %p30
    %p32 = scmp.ne.s32.totalorder %s21, %s24
    %p33 = scmp.eq.s32.totalorder %s16, 1
    %p34 = por %p32, %p33
    %p35 = scmp.ne.s32.totalorder %s24, %s25
    %p36 = scmp.eq.s32.totalorder %s16, 0
    %p37 = por %p35, %p36
    %p38 = scmp.ne.s32.totalorder %s24, %s25
    %p39 = scmp.eq.s32.totalorder %s17, 1
    %p40 = por %p38, %p39
    %p42 = scmp.ne.s32.totalorder %s25, %s41
    %p43 = scmp.eq.s32.totalorder %s17, 0
    %p44 = por %p42, %p43
    %s46 = sadd.s32 %s45, 1
    %p49 = scmp.eq.s32.totalorder %s11, 1
    %p50 = scmp.ne.s32.totalorder %s45, %s47
    %p51 = scmp.eq.s32.totalorder %s11, 0
    %p52 = por %p50, %p51
    %p53 = scmp.ne.s32.totalorder %s45, %s47
    %p54 = scmp.eq.s32.totalorder %s16, 1
    %p55 = por %p53, %p54
    %p56 = scmp.ne.s32.totalorder %s47, %s48
    %p57 = scmp.eq.s32.totalorder %s16, 0
    %p58 = por %p56, %p57
    %p59 = scmp.ne.s32.totalorder %s47, %s48
    %p60 = scmp.eq.s32.totalorder %s17, 1
    %p61 = por %p59, %p60
    %p63 = scmp.ne.s32.totalorder %s48, %s62
    %p64 = scmp.eq.s32.totalorder %s17, 0
    %p65 = por %p63, %p64
    %s67 = sadd.s32 %s66, 1
    %p70 = scmp.eq.s32.totalorder %s11, 1
    %p71 = scmp.ne.s32.totalorder %s66, %s68
    %p72 = scmp.eq.s32.totalorder %s11, 0
    %p73 = por %p71, %p72
    %p74 = scmp.ne.s32.totalorder %s66, %s68
    %p75 = scmp.eq.s32.totalorder %s16, 1
    %p76 = por %p74, %p75
    %p77 = scmp.ne.s32.totalorder %s68, %s69
    %p78 = scmp.eq.s32.totalorder %s16, 0
    %p79 = por %p77, %p78
    %p80 = scmp.ne.s32.totalorder %s68, %s69
    %p81 = scmp.eq.s32.totalorder %s17, 1
    %p82 = por %p80, %p81
    %p84 = scmp.ne.s32.totalorder %s69, %s83
    %p85 = scmp.eq.s32.totalorder %s17, 0
    %p86 = por %p84, %p85
    %s88 = sadd.s32 %s87, 1
    %p91 = scmp.eq.s32.totalorder %s11, 1
    %p92 = scmp.ne.s32.totalorder %s87, %s89
    %p93 = scmp.eq.s32.totalorder %s11, 0
    %p94 = por %p92, %p93
    %p95 = scmp.ne.s32.totalorder %s87, %s89
    %p96 = scmp.eq.s32.totalorder %s16, 1
    %p97 = por %p95, %p96
    %p98 = scmp.ne.s32.totalorder %s89, %s90
    %p99 = scmp.eq.s32.totalorder %s16, 0
    %p100 = por %p98, %p99
    %p101 = scmp.ne.s32.totalorder %s89, %s90
    %p102 = scmp.eq.s32.totalorder %s17, 1
    %p103 = por %p101, %p102
    %p105 = scmp.ne.s32.totalorder %s90, %s104
    %p106 = scmp.eq.s32.totalorder %s17, 0
    %p107 = por %p105, %p106
    %s108 = ssub.s32 %s11, %s18
    %p109 = scmp.eq.s32.totalorder %s108, 0
    %s111 = sadd.s32 %s110, 1
    %s112 = scalar_select %p109, %s110, %s111
    %p115 = pneg %p109
    %p116 = scmp.eq.s32.totalorder %s11, 1
    %p117 = por %p115, %p116
    %p118 = scmp.ne.s32.totalorder %s110, %s113
    %p119 = scmp.eq.s32.totalorder %s11, 0
    %p120 = por %p118, %p119
    %p121 = scmp.ne.s32.totalorder %s110, %s113
    %p122 = scmp.eq.s32.totalorder %s16, 1
    %p123 = por %p121, %p122
    %p124 = scmp.ne.s32.totalorder %s113, %s114
    %p125 = scmp.eq.s32.totalorder %s16, 0
    %p126 = por %p124, %p125
    %p127 = scmp.ne.s32.totalorder %s113, %s114
    %p128 = scmp.eq.s32.totalorder %s17, 1
    %p129 = por %p127, %p128
    %p131 = scmp.ne.s32.totalorder %s114, %s130
    %p132 = scmp.eq.s32.totalorder %s17, 0
    %p133 = por %p131, %p132
    %p134 = scmp.le.s32.totalorder 1, %s11
    %p135 = scmp.lt.s32.totalorder %s11, 3
    %p136 = pnand %p134, %p135
    %p137 = pneg %p136
    // Predicated region
    $region9: #{marine_debris_detector.1} parent=5 // pred_check
      _
    $region10: #{marine_debris_detector.1} parent=5 // pred_check_branch
      %139 = sbr.rel (%p136) target = $region12
    $region11: #{marine_debris_detector.1} parent=5 // pred_region
      %s140 = ssub.s32 %s11, 1
      // Predicated region
      $region13: #{marine_debris_detector.1} parent=11 // pred_check
        %p141 = pneg %p58
      $region14: #{marine_debris_detector.1} parent=11 // pred_check_branch
        %143 = sbr.rel (%p141) target = $region16
      $region15: #{marine_debris_detector.1} parent=11 // pred_region
        _
      $region16: #{marine_debris_detector.1} parent=11 // pred_fallthru
        _
      // Predicated region
      $region17: #{marine_debris_detector.1} parent=11 // pred_check
        %p144 = pneg %p79
      $region18: #{marine_debris_detector.1} parent=11 // pred_check_branch
        %146 = sbr.rel (%p144) target = $region20
      $region19: #{marine_debris_detector.1} parent=11 // pred_region
        _
      $region20: #{marine_debris_detector.1} parent=11 // pred_fallthru
        _
      // Predicated region
      $region21: #{marine_debris_detector.1} parent=11 // pred_check
        %p147 = pneg %p100
      $region22: #{marine_debris_detector.1} parent=11 // pred_check_branch
        %149 = sbr.rel (%p147) target = $region24
      $region23: #{marine_debris_detector.1} parent=11 // pred_region
        _
      $region24: #{marine_debris_detector.1} parent=11 // pred_fallthru
        _
    $region12: #{marine_debris_detector.1} parent=5 // pred_fallthru
      _
    %p150 = scmp.lt.s32.totalorder %s11, 2
    // Predicated region
    $region25: #{marine_debris_detector.1} parent=5 // pred_check
      %p151 = pneg %p150
    $region26: #{marine_debris_detector.1} parent=5 // pred_check_branch
      %153 = sbr.rel (%p151) target = $region28
    $region27: #{marine_debris_detector.1} parent=5 // pred_region
      // Predicated region
      $region29: #{marine_debris_detector.1} parent=27 // pred_check
        %p154 = pneg %p31
      $region30: #{marine_debris_detector.1} parent=27 // pred_check_branch
        %156 = sbr.rel (%p154) target = $region32
      $region31: #{marine_debris_detector.1} parent=27 // pred_region
        %p157 = scmp.lt.s32.totalorder %s11, 1
        %s158 = scalar_select %p157, %s11, 1
        %s159 = smul.addr %s158, 128
        %s160 = smul.addr %s159, 4
        %s161 = scalar_lea.vmem %s0, %s160
      $region32: #{marine_debris_detector.1} parent=27 // pred_fallthru
        _
    $region28: #{marine_debris_detector.1} parent=5 // pred_fallthru
      _
    %p162 = scmp.le.s32.totalorder 1, %s11
    %p163 = scmp.lt.s32.totalorder %s11, 3
    %p164 = pnand %p162, %p163
    %p165 = pneg %p164
    // Predicated region
    $region33: #{marine_debris_detector.1} parent=5 // pred_check
      _
    $region34: #{marine_debris_detector.1} parent=5 // pred_check_branch
      %167 = sbr.rel (%p164) target = $region36
    $region35: #{marine_debris_detector.1} parent=5 // pred_region
      %s168 = ssub.s32 %s11, 1
      %p169 = scmp.lt.s32.totalorder %s16, 1
      %s170 = scalar_select %p169, %s16, 1
      %s171 = smul.addr %s170, 128
      %s172 = smul.addr %s171, 4
      %s173 = scalar_lea.vmem %s0, %s172
      %p174 = pneg %p37
      %p175 = pneg %p34
      %p176 = pneg %p58
      %p177 = pneg %p55
      %p178 = pneg %p79
      %p179 = pneg %p76
      %p180 = pneg %p100
      %p181 = pneg %p97
      %p182 = pneg %p126
      %p183 = pneg %p123
      %p184 = scmp.lt.s32.totalorder %s16, 1
      %s185 = scalar_select %p184, %s16, 1
      %s186 = smul.addr %s185, 2
      %s187 = scalar_lea.vmem %s4, %s186
      %p188 = scmp.lt.s32.totalorder %s16, 1
      %s189 = scalar_select %p188, %s16, 1
      %s190 = smul.addr %s189, 128
      %s191 = smul.addr %s190, 4
      %s192 = scalar_lea.vmem %s0, %s191
      %p193 = scmp.lt.s32.totalorder %s16, 1
      %s194 = scalar_select %p193, %s16, 1
      %s195 = smul.addr %s194, 2
      %s196 = scalar_lea.vmem %s4, %s195
      %v198 = vld [vmem:[%s1] sm:$0xf]
      %v199 = vld [vmem:[%s1 + $0x4] sm:$0xf]
      %v200 = vld [vmem:[%s1 + $0x8] sm:$0xf]
      %v201 = vld [vmem:[%s1 + $0xc] sm:$0xf]
      %v202 = vld [vmem:[%s1 + $0x10] sm:$0xf]
      %v203 = vld [vmem:[%s1 + $0x14] sm:$0xf]
      %v204 = vld [vmem:[%s1 + $0x18] sm:$0xf]
      %v205 = vld [vmem:[%s1 + $0x1c] sm:$0xf]
      %v206 = vld [vmem:[%s192] sm:$0xff]
      %v207 = vld [vmem:[%s192 + $0x8] sm:$0xff]
      %v208 = vld [vmem:[%s192 + $0x10] sm:$0xff]
      %v209 = vld [vmem:[%s192 + $0x18] sm:$0xff]
      %v210 = vld [vmem:[%s192 + $0x20] sm:$0xff]
      %v211 = vld [vmem:[%s192 + $0x28] sm:$0xff]
      %v212 = vld [vmem:[%s192 + $0x30] sm:$0xff]
      %v213 = vld [vmem:[%s192 + $0x38] sm:$0xff]
      %v214 = vld [vmem:[%s192 + $0x40] sm:$0xff]
      %v215 = vld [vmem:[%s192 + $0x48] sm:$0xff]
      %v216 = vld [vmem:[%s192 + $0x50] sm:$0xff]
      %v217 = vld [vmem:[%s192 + $0x58] sm:$0xff]
      %v218 = vld [vmem:[%s192 + $0x60] sm:$0xff]
      %v219 = vld [vmem:[%s192 + $0x68] sm:$0xff]
      %v220 = vld [vmem:[%s192 + $0x70] sm:$0xff]
      %v221 = vld [vmem:[%s192 + $0x78] sm:$0xff]
      %v222 = vld [vmem:[%s192 + $0x80] sm:$0xff]
      %v223 = vld [vmem:[%s192 + $0x88] sm:$0xff]
      %v224 = vld [vmem:[%s192 + $0x90] sm:$0xff]
      %v225 = vld [vmem:[%s192 + $0x98] sm:$0xff]
      %v226 = vld [vmem:[%s192 + $0xa0] sm:$0xff]
      %v227 = vld [vmem:[%s192 + $0xa8] sm:$0xff]
      %v228 = vld [vmem:[%s192 + $0xb0] sm:$0xff]
      %v229 = vld [vmem:[%s192 + $0xb8] sm:$0xff]
      %v230 = vld [vmem:[%s192 + $0xc0] sm:$0xff]
      %v231 = vld [vmem:[%s192 + $0xc8] sm:$0xff]
      %v232 = vld [vmem:[%s192 + $0xd0] sm:$0xff]
      %v233 = vld [vmem:[%s192 + $0xd8] sm:$0xff]
      %v234 = vld [vmem:[%s192 + $0xe0] sm:$0xff]
      %v235 = vld [vmem:[%s192 + $0xe8] sm:$0xff]
      %v236 = vld [vmem:[%s192 + $0xf0] sm:$0xff]
      %v237 = vld [vmem:[%s192 + $0xf8] sm:$0xff]
      %v238 = vld [vmem:[%s192 + $0x100] sm:$0xff]
      %v239 = vld [vmem:[%s192 + $0x108] sm:$0xff]
      %v240 = vld [vmem:[%s192 + $0x110] sm:$0xff]
      %v241 = vld [vmem:[%s192 + $0x118] sm:$0xff]
      %v242 = vld [vmem:[%s192 + $0x120] sm:$0xff]
      %v243 = vld [vmem:[%s192 + $0x128] sm:$0xff]
      %v244 = vld [vmem:[%s192 + $0x130] sm:$0xff]
      %v245 = vld [vmem:[%s192 + $0x138] sm:$0xff]
      %v246 = vld [vmem:[%s192 + $0x140] sm:$0xff]
      %v247 = vld [vmem:[%s192 + $0x148] sm:$0xff]
      %v248 = vld [vmem:[%s192 + $0x150] sm:$0xff]
      %v249 = vld [vmem:[%s192 + $0x158] sm:$0xff]
      %v250 = vld [vmem:[%s192 + $0x160] sm:$0xff]
      %v251 = vld [vmem:[%s192 + $0x168] sm:$0xff]
      %v252 = vld [vmem:[%s192 + $0x170] sm:$0xff]
      %v253 = vld [vmem:[%s192 + $0x178] sm:$0xff]
      %v254 = vld [vmem:[%s192 + $0x180] sm:$0xff]
      %v255 = vld [vmem:[%s192 + $0x188] sm:$0xff]
      %v256 = vld [vmem:[%s192 + $0x190] sm:$0xff]
      %v257 = vld [vmem:[%s192 + $0x198] sm:$0xff]
      %v258 = vld [vmem:[%s192 + $0x1a0] sm:$0xff]
      %v259 = vld [vmem:[%s192 + $0x1a8] sm:$0xff]
      %v260 = vld [vmem:[%s192 + $0x1b0] sm:$0xff]
      %v261 = vld [vmem:[%s192 + $0x1b8] sm:$0xff]
      %v262 = vld [vmem:[%s192 + $0x1c0] sm:$0xff]
      %v263 = vld [vmem:[%s192 + $0x1c8] sm:$0xff]
      %v264 = vld [vmem:[%s192 + $0x1d0] sm:$0xff]
      %v265 = vld [vmem:[%s192 + $0x1d8] sm:$0xff]
      %v266 = vld [vmem:[%s192 + $0x1e0] sm:$0xff]
      %v267 = vld [vmem:[%s192 + $0x1e8] sm:$0xff]
      %v268 = vld [vmem:[%s192 + $0x1f0] sm:$0xff]
      %v269 = vld [vmem:[%s192 + $0x1f8] sm:$0xff]
      %v278 = vunpack.c.l.b16 %v198
      %v279 = vunpack.c.l.b16 %v199
      %v280 = vunpack.c.l.b16 %v200
      %v281 = vunpack.c.l.b16 %v201
      %v282 = vunpack.c.l.b16 %v202
      %v283 = vunpack.c.l.b16 %v203
      %v284 = vunpack.c.l.b16 %v204
      %v285 = vunpack.c.l.b16 %v205
      %v286 = vpack.c.b16 %v279, %v278
      %v287 = vpack.c.b16 %v281, %v280
      %v288 = vpack.c.b16 %v283, %v282
      %v289 = vpack.c.b16 %v285, %v284
      %v358 = vunpack.c.l.b16 %v206
      %v359 = vunpack.c.h.b16 %v206
      %v360 = vunpack.c.l.b16 %v207
      %v361 = vunpack.c.h.b16 %v207
      %v362 = vunpack.c.l.b16 %v208
      %v363 = vunpack.c.h.b16 %v208
      %v364 = vunpack.c.l.b16 %v209
      %v365 = vunpack.c.h.b16 %v209
      %v366 = vunpack.c.l.b16 %v210
      %v367 = vunpack.c.h.b16 %v210
      %v368 = vunpack.c.l.b16 %v211
      %v369 = vunpack.c.h.b16 %v211
      %v370 = vunpack.c.l.b16 %v212
      %v371 = vunpack.c.h.b16 %v212
      %v372 = vunpack.c.l.b16 %v213
      %v373 = vunpack.c.h.b16 %v213
      %v374 = vunpack.c.l.b16 %v214
      %v375 = vunpack.c.h.b16 %v214
      %v376 = vunpack.c.l.b16 %v215
      %v377 = vunpack.c.h.b16 %v215
      %v378 = vunpack.c.l.b16 %v216
      %v379 = vunpack.c.h.b16 %v216
      %v380 = vunpack.c.l.b16 %v217
      %v381 = vunpack.c.h.b16 %v217
      %v382 = vunpack.c.l.b16 %v218
      %v383 = vunpack.c.h.b16 %v218
      %v384 = vunpack.c.l.b16 %v219
      %v385 = vunpack.c.h.b16 %v219
      %v386 = vunpack.c.l.b16 %v220
      %v387 = vunpack.c.h.b16 %v220
      %v388 = vunpack.c.l.b16 %v221
      %v389 = vunpack.c.h.b16 %v221
      %v390 = vunpack.c.l.b16 %v222
      %v391 = vunpack.c.h.b16 %v222
      %v392 = vunpack.c.l.b16 %v223
      %v393 = vunpack.c.h.b16 %v223
      %v394 = vunpack.c.l.b16 %v224
      %v395 = vunpack.c.h.b16 %v224
      %v396 = vunpack.c.l.b16 %v225
      %v397 = vunpack.c.h.b16 %v225
      %v398 = vunpack.c.l.b16 %v226
      %v399 = vunpack.c.h.b16 %v226
      %v400 = vunpack.c.l.b16 %v227
      %v401 = vunpack.c.h.b16 %v227
      %v402 = vunpack.c.l.b16 %v228
      %v403 = vunpack.c.h.b16 %v228
      %v404 = vunpack.c.l.b16 %v229
      %v405 = vunpack.c.h.b16 %v229
      %v406 = vunpack.c.l.b16 %v230
      %v407 = vunpack.c.h.b16 %v230
      %v408 = vunpack.c.l.b16 %v231
      %v409 = vunpack.c.h.b16 %v231
      %v410 = vunpack.c.l.b16 %v232
      %v411 = vunpack.c.h.b16 %v232
      %v412 = vunpack.c.l.b16 %v233
      %v413 = vunpack.c.h.b16 %v233
      %v414 = vunpack.c.l.b16 %v234
      %v415 = vunpack.c.h.b16 %v234
      %v416 = vunpack.c.l.b16 %v235
      %v417 = vunpack.c.h.b16 %v235
      %v418 = vunpack.c.l.b16 %v236
      %v419 = vunpack.c.h.b16 %v236
      %v420 = vunpack.c.l.b16 %v237
      %v421 = vunpack.c.h.b16 %v237
      %v422 = vunpack.c.l.b16 %v238
      %v423 = vunpack.c.h.b16 %v238
      %v424 = vunpack.c.l.b16 %v239
      %v425 = vunpack.c.h.b16 %v239
      %v426 = vunpack.c.l.b16 %v240
      %v427 = vunpack.c.h.b16 %v240
      %v428 = vunpack.c.l.b16 %v241
      %v429 = vunpack.c.h.b16 %v241
      %v430 = vunpack.c.l.b16 %v242
      %v431 = vunpack.c.h.b16 %v242
      %v432 = vunpack.c.l.b16 %v243
      %v433 = vunpack.c.h.b16 %v243
      %v434 = vunpack.c.l.b16 %v244
      %v435 = vunpack.c.h.b16 %v244
      %v436 = vunpack.c.l.b16 %v245
      %v437 = vunpack.c.h.b16 %v245
      %v438 = vunpack.c.l.b16 %v246
      %v439 = vunpack.c.h.b16 %v246
      %v440 = vunpack.c.l.b16 %v247
      %v441 = vunpack.c.h.b16 %v247
      %v442 = vunpack.c.l.b16 %v248
      %v443 = vunpack.c.h.b16 %v248
      %v444 = vunpack.c.l.b16 %v249
      %v445 = vunpack.c.h.b16 %v249
      %v446 = vunpack.c.l.b16 %v250
      %v447 = vunpack.c.h.b16 %v250
      %v448 = vunpack.c.l.b16 %v251
      %v449 = vunpack.c.h.b16 %v251
      %v450 = vunpack.c.l.b16 %v252
      %v451 = vunpack.c.h.b16 %v252
      %v452 = vunpack.c.l.b16 %v253
      %v453 = vunpack.c.h.b16 %v253
      %v454 = vunpack.c.l.b16 %v254
      %v455 = vunpack.c.h.b16 %v254
      %v456 = vunpack.c.l.b16 %v255
      %v457 = vunpack.c.h.b16 %v255
      %v458 = vunpack.c.l.b16 %v256
      %v459 = vunpack.c.h.b16 %v256
      %v460 = vunpack.c.l.b16 %v257
      %v461 = vunpack.c.h.b16 %v257
      %v462 = vunpack.c.l.b16 %v258
      %v463 = vunpack.c.h.b16 %v258
      %v464 = vunpack.c.l.b16 %v259
      %v465 = vunpack.c.h.b16 %v259
      %v466 = vunpack.c.l.b16 %v260
      %v467 = vunpack.c.h.b16 %v260
      %v468 = vunpack.c.l.b16 %v261
      %v469 = vunpack.c.h.b16 %v261
      %v470 = vunpack.c.l.b16 %v262
      %v471 = vunpack.c.h.b16 %v262
      %v472 = vunpack.c.l.b16 %v263
      %v473 = vunpack.c.h.b16 %v263
      %v474 = vunpack.c.l.b16 %v264
      %v475 = vunpack.c.h.b16 %v264
      %v476 = vunpack.c.l.b16 %v265
      %v477 = vunpack.c.h.b16 %v265
      %v478 = vunpack.c.l.b16 %v266
      %v479 = vunpack.c.h.b16 %v266
      %v480 = vunpack.c.l.b16 %v267
      %v481 = vunpack.c.h.b16 %v267
      %v482 = vunpack.c.l.b16 %v268
      %v483 = vunpack.c.h.b16 %v268
      %v484 = vunpack.c.l.b16 %v269
      %v485 = vunpack.c.h.b16 %v269
      %v486 = vpack.c.b16 %v366, %v358
      %v487 = vpack.c.b16 %v367, %v359
      %v488 = vpack.c.b16 %v368, %v360
      %v489 = vpack.c.b16 %v369, %v361
      %v490 = vpack.c.b16 %v370, %v362
      %v491 = vpack.c.b16 %v371, %v363
      %v492 = vpack.c.b16 %v372, %v364
      %v493 = vpack.c.b16 %v373, %v365
      %v494 = vpack.c.b16 %v382, %v374
      %v495 = vpack.c.b16 %v383, %v375
      %v496 = vpack.c.b16 %v384, %v376
      %v497 = vpack.c.b16 %v385, %v377
      %v498 = vpack.c.b16 %v386, %v378
      %v499 = vpack.c.b16 %v387, %v379
      %v500 = vpack.c.b16 %v388, %v380
      %v501 = vpack.c.b16 %v389, %v381
      %v502 = vpack.c.b16 %v398, %v390
      %v503 = vpack.c.b16 %v399, %v391
      %v504 = vpack.c.b16 %v400, %v392
      %v505 = vpack.c.b16 %v401, %v393
      %v506 = vpack.c.b16 %v402, %v394
      %v507 = vpack.c.b16 %v403, %v395
      %v508 = vpack.c.b16 %v404, %v396
      %v509 = vpack.c.b16 %v405, %v397
      %v510 = vpack.c.b16 %v414, %v406
      %v511 = vpack.c.b16 %v415, %v407
      %v512 = vpack.c.b16 %v416, %v408
      %v513 = vpack.c.b16 %v417, %v409
      %v514 = vpack.c.b16 %v418, %v410
      %v515 = vpack.c.b16 %v419, %v411
      %v516 = vpack.c.b16 %v420, %v412
      %v517 = vpack.c.b16 %v421, %v413
      %v518 = vpack.c.b16 %v430, %v422
      %v519 = vpack.c.b16 %v431, %v423
      %v520 = vpack.c.b16 %v432, %v424
      %v521 = vpack.c.b16 %v433, %v425
      %v522 = vpack.c.b16 %v434, %v426
      %v523 = vpack.c.b16 %v435, %v427
      %v524 = vpack.c.b16 %v436, %v428
      %v525 = vpack.c.b16 %v437, %v429
      %v526 = vpack.c.b16 %v446, %v438
      %v527 = vpack.c.b16 %v447, %v439
      %v528 = vpack.c.b16 %v448, %v440
      %v529 = vpack.c.b16 %v449, %v441
      %v530 = vpack.c.b16 %v450, %v442
      %v531 = vpack.c.b16 %v451, %v443
      %v532 = vpack.c.b16 %v452, %v444
      %v533 = vpack.c.b16 %v453, %v445
      %v534 = vpack.c.b16 %v462, %v454
      %v535 = vpack.c.b16 %v463, %v455
      %v536 = vpack.c.b16 %v464, %v456
      %v537 = vpack.c.b16 %v465, %v457
      %v538 = vpack.c.b16 %v466, %v458
      %v539 = vpack.c.b16 %v467, %v459
      %v540 = vpack.c.b16 %v468, %v460
      %v541 = vpack.c.b16 %v469, %v461
      %v542 = vpack.c.b16 %v478, %v470
      %v543 = vpack.c.b16 %v479, %v471
      %v544 = vpack.c.b16 %v480, %v472
      %v545 = vpack.c.b16 %v481, %v473
      %v546 = vpack.c.b16 %v482, %v474
      %v547 = vpack.c.b16 %v483, %v475
      %v548 = vpack.c.b16 %v484, %v476
      %v549 = vpack.c.b16 %v485, %v477
      %614 = vmatprep.subr.bf16.mxu0 %v487
      %615 = vmatpush1.bf16.msra.mxu0 %v486
      %616 = vmatprep.subr.bf16.mxu0 %v495
      %617 = vmatpush1.bf16.msra.mxu0 %v494
      %618 = vmatprep.subr.bf16.mxu0 %v503
      %619 = vmatpush1.bf16.msra.mxu0 %v502
      %620 = vmatprep.subr.bf16.mxu0 %v511
      %621 = vmatpush1.bf16.msra.mxu0 %v510
      %622 = vmatprep.subr.bf16.mxu0 %v519
      %623 = vmatpush1.bf16.msra.mxu0 %v518
      %624 = vmatprep.subr.bf16.mxu0 %v527
      %625 = vmatpush1.bf16.msra.mxu0 %v526
      %626 = vmatprep.subr.bf16.mxu0 %v535
      %627 = vmatpush1.bf16.msra.mxu0 %v534
      %628 = vmatprep.subr.bf16.mxu0 %v543
      %629 = vmatpush1.bf16.msra.mxu0 %v542
      %630 = vmatprep.subr.bf16.mxu0 0
      %631 = vmatpush1.bf16.msra.mxu0 0
      %632 = vmatprep.subr.bf16.mxu0 0
      %633 = vmatpush1.bf16.msra.mxu0 0
      %634 = vmatprep.subr.bf16.mxu0 0
      %635 = vmatpush1.bf16.msra.mxu0 0
      %636 = vmatprep.subr.bf16.mxu0 0
      %637 = vmatpush1.bf16.msra.mxu0 0
      %638 = vmatprep.subr.bf16.mxu0 0
      %639 = vmatpush1.bf16.msra.mxu0 0
      %640 = vmatprep.subr.bf16.mxu0 0
      %641 = vmatpush1.bf16.msra.mxu0 0
      %642 = vmatprep.subr.bf16.mxu0 0
      %643 = vmatpush1.bf16.msra.mxu0 0
      %644 = vmatprep.subr.bf16.mxu0 0
      %645 = vmatpush1.bf16.msra.mxu0 0
      %646 = vmatprep.mubr.bf16.mxu0 0
      %647 = vmatmul.mubr.bf16.gmra.mrb[0].mxu0 %v286
      %v648 = vpop.f32.mrb[0].mxu0
      %v649 = vadd.f32 0.0, %v648
      %v650 = vpop.f32.mrb[0].mxu0
      %v651 = vadd.f32 0.0, %v650
      %v652 = vpop.f32.mrb[0].mxu0
      %v653 = vadd.f32 0.0, %v652
      %v654 = vpop.f32.mrb[0].mxu0
      %v655 = vadd.f32 0.0, %v654
      %656 = vmatprep.mubr.bf16.mxu0 0
      %657 = vmatmul.mubr.bf16.gmra.mrb[0].mxu0 %v287
      %v658 = vpop.f32.mrb[0].mxu0
      %v659 = vadd.f32 0.0, %v658
      %v660 = vpop.f32.mrb[0].mxu0
      %v661 = vadd.f32 0.0, %v660
      %v662 = vpop.f32.mrb[0].mxu0
      %v663 = vadd.f32 0.0, %v662
      %v664 = vpop.f32.mrb[0].mxu0
      %v665 = vadd.f32 0.0, %v664
      %666 = vmatprep.mubr.bf16.mxu0 0
      %667 = vmatmul.mubr.bf16.gmra.mrb[0].mxu0 %v288
      %v668 = vpop.f32.mrb[0].mxu0
      %v669 = vadd.f32 0.0, %v668
      %v670 = vpop.f32.mrb[0].mxu0
      %v671 = vadd.f32 0.0, %v670
      %v672 = vpop.f32.mrb[0].mxu0
      %v673 = vadd.f32 0.0, %v672
      %v674 = vpop.f32.mrb[0].mxu0
      %v675 = vadd.f32 0.0, %v674
      %676 = vmatprep.mubr.bf16.mxu0 0
      %677 = vmatmul.mubr.bf16.gmra.mrb[0].mxu0 %v289
      %v678 = vpop.f32.mrb[0].mxu0
      %v679 = vadd.f32 0.0, %v678
      %v680 = vpop.f32.mrb[0].mxu0
      %v681 = vadd.f32 0.0, %v680
      %v682 = vpop.f32.mrb[0].mxu0
      %v683 = vadd.f32 0.0, %v682
      %v684 = vpop.f32.mrb[0].mxu0
      %v685 = vadd.f32 0.0, %v684
      %686 = vdwg.mxu0
      %687 = vmatprep.subr.bf16.mxu0 %v489
      %688 = vmatpush1.bf16.msra.mxu0 %v488
      %689 = vmatprep.subr.bf16.mxu0 %v497
      %690 = vmatpush1.bf16.msra.mxu0 %v496
      %691 = vmatprep.subr.bf16.mxu0 %v505
      %692 = vmatpush1.bf16.msra.mxu0 %v504
      %693 = vmatprep.subr.bf16.mxu0 %v513
      %694 = vmatpush1.bf16.msra.mxu0 %v512
      %695 = vmatprep.subr.bf16.mxu0 %v521
      %696 = vmatpush1.bf16.msra.mxu0 %v520
      %697 = vmatprep.subr.bf16.mxu0 %v529
      %698 = vmatpush1.bf16.msra.mxu0 %v528
      %699 = vmatprep.subr.bf16.mxu0 %v537
      %700 = vmatpush1.bf16.msra.mxu0 %v536
      %701 = vmatprep.subr.bf16.mxu0 %v545
      %702 = vmatpush1.bf16.msra.mxu0 %v544
      %703 = vmatprep.subr.bf16.mxu0 0
      %704 = vmatpush1.bf16.msra.mxu0 0
      %705 = vmatprep.subr.bf16.mxu0 0
      %706 = vmatpush1.bf16.msra.mxu0 0
      %707 = vmatprep.subr.bf16.mxu0 0
      %708 = vmatpush1.bf16.msra.mxu0 0
      %709 = vmatprep.subr.bf16.mxu0 0
      %710 = vmatpush1.bf16.msra.mxu0 0
      %711 = vmatprep.subr.bf16.mxu0 0
      %712 = vmatpush1.bf16.msra.mxu0 0
      %713 = vmatprep.subr.bf16.mxu0 0
      %714 = vmatpush1.bf16.msra.mxu0 0
      %715 = vmatprep.subr.bf16.mxu0 0
      %716 = vmatpush1.bf16.msra.mxu0 0
      %717 = vmatprep.subr.bf16.mxu0 0
      %718 = vmatpush1.bf16.msra.mxu0 0
      %719 = vmatprep.mubr.bf16.mxu0 0
      %720 = vmatmul.mubr.bf16.gmra.mrb[0].mxu0 %v286
      %v721 = vpop.f32.mrb[0].mxu0
      %v722 = vadd.f32 0.0, %v721
      %v723 = vpop.f32.mrb[0].mxu0
      %v724 = vadd.f32 0.0, %v723
      %v725 = vpop.f32.mrb[0].mxu0
      %v726 = vadd.f32 0.0, %v725
      %v727 = vpop.f32.mrb[0].mxu0
      %v728 = vadd.f32 0.0, %v727
      %729 = vmatprep.mubr.bf16.mxu0 0
      %730 = vmatmul.mubr.bf16.gmra.mrb[0].mxu0 %v287
      %v731 = vpop.f32.mrb[0].mxu0
      %v732 = vadd.f32 0.0, %v731
      %v733 = vpop.f32.mrb[0].mxu0
      %v734 = vadd.f32 0.0, %v733
      %v735 = vpop.f32.mrb[0].mxu0
      %v736 = vadd.f32 0.0, %v735
      %v737 = vpop.f32.mrb[0].mxu0
      %v738 = vadd.f32 0.0, %v737
      %739 = vmatprep.mubr.bf16.mxu0 0
      %740 = vmatmul.mubr.bf16.gmra.mrb[0].mxu0 %v288
      %v741 = vpop.f32.mrb[0].mxu0
      %v742 = vpop.f32.mrb[0].mxu0
      %v743 = vpop.f32.mrb[0].mxu0
      %v744 = vpop.f32.mrb[0].mxu0
      %745 = vmatprep.mubr.bf16.mxu0 0
      %746 = vmatmul.mubr.bf16.gmra.mrb[0].mxu0 %v289
      %v747 = vpop.f32.mrb[0].mxu0
      %v748 = vpop.f32.mrb[0].mxu0
      %v749 = vpop.f32.mrb[0].mxu0
      %v750 = vpop.f32.mrb[0].mxu0
      %751 = vdwg.mxu0
      %752 = vmatprep.subr.bf16.mxu0 %v491
      %753 = vmatpush1.bf16.msra.mxu0 %v490
      %754 = vmatprep.subr.bf16.mxu0 %v499
      %755 = vmatpush1.bf16.msra.mxu0 %v498
      %756 = vmatprep.subr.bf16.mxu0 %v507
      %757 = vmatpush1.bf16.msra.mxu0 %v506
      %758 = vmatprep.subr.bf16.mxu0 %v515
      %759 = vmatpush1.bf16.msra.mxu0 %v514
      %760 = vmatprep.subr.bf16.mxu0 %v523
      %761 = vmatpush1.bf16.msra.mxu0 %v522
      %762 = vmatprep.subr.bf16.mxu0 %v531
      %763 = vmatpush1.bf16.msra.mxu0 %v530
      %764 = vmatprep.subr.bf16.mxu0 %v539
      %765 = vmatpush1.bf16.msra.mxu0 %v538
      %766 = vmatprep.subr.bf16.mxu0 %v547
      %767 = vmatpush1.bf16.msra.mxu0 %v546
      %768 = vmatprep.subr.bf16.mxu0 0
      %769 = vmatpush1.bf16.msra.mxu0 0
      %770 = vmatprep.subr.bf16.mxu0 0
      %771 = vmatpush1.bf16.msra.mxu0 0
      %772 = vmatprep.subr.bf16.mxu0 0
      %773 = vmatpush1.bf16.msra.mxu0 0
      %774 = vmatprep.subr.bf16.mxu0 0
      %775 = vmatpush1.bf16.msra.mxu0 0
      %776 = vmatprep.subr.bf16.mxu0 0
      %777 = vmatpush1.bf16.msra.mxu0 0
      %778 = vmatprep.subr.bf16.mxu0 0
      %779 = vmatpush1.bf16.msra.mxu0 0
      %780 = vmatprep.subr.bf16.mxu0 0
      %781 = vmatpush1.bf16.msra.mxu0 0
      %782 = vmatprep.subr.bf16.mxu0 0
      %783 = vmatpush1.bf16.msra.mxu0 0
      %784 = vmatprep.mubr.bf16.mxu0 0
      %785 = vmatmul.mubr.bf16.gmra.mrb[0].mxu0 %v286
      %v786 = vpop.f32.mrb[0].mxu0
      %v787 = vadd.f32 0.0, %v786
      %v788 = vpop.f32.mrb[0].mxu0
      %v789 = vadd.f32 0.0, %v788
      %v790 = vpop.f32.mrb[0].mxu0
      %v791 = vadd.f32 0.0, %v790
      %v792 = vpop.f32.mrb[0].mxu0
      %v793 = vadd.f32 0.0, %v792
      %794 = vmatprep.mubr.bf16.mxu0 0
      %795 = vmatmul.mubr.bf16.gmra.mrb[0].mxu0 %v287
      %v796 = vpop.f32.mrb[0].mxu0
      %v797 = vadd.f32 0.0, %v796
      %v798 = vpop.f32.mrb[0].mxu0
      %v799 = vadd.f32 0.0, %v798
      %v800 = vpop.f32.mrb[0].mxu0
      %v801 = vadd.f32 0.0, %v800
      %v802 = vpop.f32.mrb[0].mxu0
      %v803 = vadd.f32 0.0, %v802
      %804 = vmatprep.mubr.bf16.mxu0 0
      %805 = vmatmul.mubr.bf16.gmra.mrb[0].mxu0 %v288
      %v806 = vpop.f32.mrb[0].mxu0
      %v807 = vpop.f32.mrb[0].mxu0
      %v808 = vpop.f32.mrb[0].mxu0
      %v809 = vpop.f32.mrb[0].mxu0
      %810 = vmatprep.mubr.bf16.mxu0 0
      %811 = vmatmul.mubr.bf16.gmra.mrb[0].mxu0 %v289
      %v812 = vpop.f32.mrb[0].mxu0
      %v813 = vpop.f32.mrb[0].mxu0
      %v814 = vpop.f32.mrb[0].mxu0
      %v815 = vpop.f32.mrb[0].mxu0
      %816 = vdwg.mxu0
      %817 = vmatprep.subr.bf16.mxu0 %v493
      %818 = vmatpush1.bf16.msra.mxu0 %v492
      %819 = vmatprep.subr.bf16.mxu0 %v501
      %820 = vmatpush1.bf16.msra.mxu0 %v500
      %821 = vmatprep.subr.bf16.mxu0 %v509
      %822 = vmatpush1.bf16.msra.mxu0 %v508
      %823 = vmatprep.subr.bf16.mxu0 %v517
      %824 = vmatpush1.bf16.msra.mxu0 %v516
      %825 = vmatprep.subr.bf16.mxu0 %v525
      %826 = vmatpush1.bf16.msra.mxu0 %v524
      %827 = vmatprep.subr.bf16.mxu0 %v533
      %828 = vmatpush1.bf16.msra.mxu0 %v532
      %829 = vmatprep.subr.bf16.mxu0 %v541
      %830 = vmatpush1.bf16.msra.mxu0 %v540
      %831 = vmatprep.subr.bf16.mxu0 %v549
      %832 = vmatpush1.bf16.msra.mxu0 %v548
      %833 = vmatprep.subr.bf16.mxu0 0
      %834 = vmatpush1.bf16.msra.mxu0 0
      %835 = vmatprep.subr.bf16.mxu0 0
      %836 = vmatpush1.bf16.msra.mxu0 0
      %837 = vmatprep.subr.bf16.mxu0 0
      %838 = vmatpush1.bf16.msra.mxu0 0
      %839 = vmatprep.subr.bf16.mxu0 0
      %840 = vmatpush1.bf16.msra.mxu0 0
      %841 = vmatprep.subr.bf16.mxu0 0
      %842 = vmatpush1.bf16.msra.mxu0 0
      %843 = vmatprep.subr.bf16.mxu0 0
      %844 = vmatpush1.bf16.msra.mxu0 0
      %845 = vmatprep.subr.bf16.mxu0 0
      %846 = vmatpush1.bf16.msra.mxu0 0
      %847 = vmatprep.subr.bf16.mxu0 0
      %848 = vmatpush1.bf16.msra.mxu0 0
      %849 = vmatprep.mubr.bf16.mxu0 0
      %850 = vmatmul.mubr.bf16.gmra.mrb[0].mxu0 %v286
      %v851 = vpop.f32.mrb[0].mxu0
      %v852 = vadd.f32 0.0, %v851
      %v853 = vpop.f32.mrb[0].mxu0
      %v854 = vadd.f32 0.0, %v853
      %v855 = vpop.f32.mrb[0].mxu0
      %v856 = vadd.f32 0.0, %v855
      %v857 = vpop.f32.mrb[0].mxu0
      %v858 = vadd.f32 0.0, %v857
      %859 = vmatprep.mubr.bf16.mxu0 0
      %860 = vmatmul.mubr.bf16.gmra.mrb[0].mxu0 %v287
      %v861 = vpop.f32.mrb[0].mxu0
      %v862 = vadd.f32 0.0, %v861
      %v863 = vpop.f32.mrb[0].mxu0
      %v864 = vadd.f32 0.0, %v863
      %v865 = vpop.f32.mrb[0].mxu0
      %v866 = vadd.f32 0.0, %v865
      %v867 = vpop.f32.mrb[0].mxu0
      %v868 = vadd.f32 0.0, %v867
      %869 = vmatprep.mubr.bf16.mxu0 0
      %870 = vmatmul.mubr.bf16.gmra.mrb[0].mxu0 %v288
      %v871 = vpop.f32.mrb[0].mxu0
      %v872 = vpop.f32.mrb[0].mxu0
      %v873 = vpop.f32.mrb[0].mxu0
      %v874 = vpop.f32.mrb[0].mxu0
      %875 = vmatprep.mubr.bf16.mxu0 0
      %876 = vmatmul.mubr.bf16.gmra.mrb[0].mxu0 %v289
      %v877 = vpop.f32.mrb[0].mxu0
      %v878 = vpop.f32.mrb[0].mxu0
      %v879 = vpop.f32.mrb[0].mxu0
      %v880 = vpop.f32.mrb[0].mxu0
      %881 = vdwg.mxu0
      %v882 = vmax.f32 %v649, 0.0
      %v883 = vmax.f32 %v651, 0.0
      %v884 = vmax.f32 %v722, 0.0
      %v885 = vmax.f32 %v724, 0.0
      %v886 = vmax.f32 %v787, 0.0
      %v887 = vmax.f32 %v789, 0.0
      %v888 = vmax.f32 %v852, 0.0
      %v889 = vmax.f32 %v854, 0.0
      %v890 = vmax.f32 %v653, 0.0
      %v891 = vmax.f32 %v655, 0.0
      %v892 = vmax.f32 %v726, 0.0
      %v893 = vmax.f32 %v728, 0.0
      %v894 = vmax.f32 %v791, 0.0
      %v895 = vmax.f32 %v793, 0.0
      %v896 = vmax.f32 %v856, 0.0
      %v897 = vmax.f32 %v858, 0.0
      %v898 = vmax.f32 %v659, 0.0
      %v899 = vmax.f32 %v661, 0.0
      %v900 = vmax.f32 %v732, 0.0
      %v901 = vmax.f32 %v734, 0.0
      %v902 = vmax.f32 %v797, 0.0
      %v903 = vmax.f32 %v799, 0.0
      %v904 = vmax.f32 %v862, 0.0
      %v905 = vmax.f32 %v864, 0.0
      %v906 = vmax.f32 %v663, 0.0
      %v907 = vmax.f32 %v665, 0.0
      %v908 = vmax.f32 %v736, 0.0
      %v909 = vmax.f32 %v738, 0.0
      %v910 = vmax.f32 %v801, 0.0
      %v911 = vmax.f32 %v803, 0.0
      %v912 = vmax.f32 %v866, 0.0
      %v913 = vmax.f32 %v868, 0.0
      %v914 = vmax.f32 %v669, 0.0
      %v915 = vmax.f32 %v671, 0.0
      %v916 = vmax.f32 %v673, 0.0
      %v917 = vmax.f32 %v675, 0.0
      %v918 = vmax.f32 %v679, 0.0
      %v919 = vmax.f32 %v681, 0.0
      %v920 = vmax.f32 %v683, 0.0
      %v921 = vmax.f32 %v685, 0.0
      %v922 = vld [vmem:[%s2] sm:$0xff]
      %v923 = vld [vmem:[%s2 + $0x8] sm:$0xff]
      %v924 = vld [vmem:[%s2 + $0x10] sm:$0xff]
      %v925 = vld [vmem:[%s2 + $0x18] sm:$0xff]
      %v926 = vld [vmem:[%s2 + $0x20] sm:$0xff]
      %v927 = vld [vmem:[%s2 + $0x28] sm:$0xff]
      %v928 = vld [vmem:[%s2 + $0x30] sm:$0xff]
      %v929 = vld [vmem:[%s2 + $0x38] sm:$0xff]
      %931 = vset.pattern.permute.xlu0 0
      %932 = vperm.xlu0 %931, %v922
      %v933 = vpop.permute.xlu0 %932
      %936 = vset.pattern.permute.xlu0 0
      %937 = vperm.xlu0 %936, %v923
      %v938 = vpop.permute.xlu0 %937
      %941 = vset.pattern.permute.xlu0 0
      %942 = vperm.xlu0 %941, %v924
      %v943 = vpop.permute.xlu0 %942
      %946 = vset.pattern.permute.xlu0 0
      %947 = vperm.xlu0 %946, %v925
      %v948 = vpop.permute.xlu0 %947
      %951 = vset.pattern.permute.xlu0 0
      %952 = vperm.xlu0 %951, %v926
      %v953 = vpop.permute.xlu0 %952
      %956 = vset.pattern.permute.xlu0 0
      %957 = vperm.xlu0 %956, %v927
      %v958 = vpop.permute.xlu0 %957
      %961 = vset.pattern.permute.xlu0 0
      %962 = vperm.xlu0 %961, %v928
      %v963 = vpop.permute.xlu0 %962
      %966 = vset.pattern.permute.xlu0 0
      %967 = vperm.xlu0 %966, %v929
      %v968 = vpop.permute.xlu0 %967
      %v970 = vmul.f32 %v882, %v933
      %v971 = vmul.f32 %v883, %v933
      %v972 = vmul.f32 %v884, %v933
      %v973 = vmul.f32 %v885, %v933
      %v974 = vmul.f32 %v886, %v933
      %v975 = vmul.f32 %v887, %v933
      %v976 = vmul.f32 %v888, %v933
      %v977 = vmul.f32 %v889, %v933
      %v978 = vmul.f32 %v890, %v938
      %v979 = vmul.f32 %v891, %v938
      %v980 = vmul.f32 %v892, %v938
      %v981 = vmul.f32 %v893, %v938
      %v982 = vmul.f32 %v894, %v938
      %v983 = vmul.f32 %v895, %v938
      %v984 = vmul.f32 %v896, %v938
      %v985 = vmul.f32 %v897, %v938
      %v986 = vmul.f32 %v898, %v943
      %v987 = vmul.f32 %v899, %v943
      %v988 = vmul.f32 %v900, %v943
      %v989 = vmul.f32 %v901, %v943
      %v990 = vmul.f32 %v902, %v943
      %v991 = vmul.f32 %v903, %v943
      %v992 = vmul.f32 %v904, %v943
      %v993 = vmul.f32 %v905, %v943
      %v994 = vmul.f32 %v906, %v948
      %v995 = vmul.f32 %v907, %v948
      %v996 = vmul.f32 %v908, %v948
      %v997 = vmul.f32 %v909, %v948
      %v998 = vmul.f32 %v910, %v948
      %v999 = vmul.f32 %v911, %v948
      %v1000 = vmul.f32 %v912, %v948
      %v1001 = vmul.f32 %v913, %v948
      %v1002 = vmul.f32 %v914, %v953
      %v1003 = vmul.f32 %v915, %v953
      %v1004 = vmul.f32 %v916, %v958
      %v1005 = vmul.f32 %v917, %v958
      %v1006 = vmul.f32 %v918, %v963
      %v1007 = vmul.f32 %v919, %v963
      %v1008 = vmul.f32 %v920, %v968
      %v1009 = vmul.f32 %v921, %v968
      %v1010 = vadd.f32 %v970, %v978
      %v1011 = vadd.f32 %v1010, %v986
      %v1012 = vadd.f32 %v1011, %v994
      %v1013 = vrot.slane %v1012, 4
      %v1014 = vadd.f32 %v1012, %v1013
      %v1015 = vrot.slane %v1014, 2
      %v1016 = vadd.f32 %v1014, %v1015
      %v1017 = vrot.slane %v1016, 1
      %v1018 = vadd.f32 %v1016, %v1017
      %v1019 = vadd.f32 %v971, %v979
      %v1020 = vadd.f32 %v1019, %v987
      %v1021 = vadd.f32 %v1020, %v995
      %v1022 = vrot.slane %v1021, 4
      %v1023 = vadd.f32 %v1021, %v1022
      %v1024 = vrot.slane %v1023, 2
      %v1025 = vadd.f32 %v1023, %v1024
      %v1026 = vrot.slane %v1025, 1
      %v1027 = vadd.f32 %v1025, %v1026
      %v1028 = vadd.f32 %v972, %v980
      %v1029 = vadd.f32 %v1028, %v988
      %v1030 = vadd.f32 %v1029, %v996
      %v1031 = vrot.slane %v1030, 4
      %v1032 = vadd.f32 %v1030, %v1031
      %v1033 = vrot.slane %v1032, 2
      %v1034 = vadd.f32 %v1032, %v1033
      %v1035 = vrot.slane %v1034, 1
      %v1036 = vadd.f32 %v1034, %v1035
      %v1037 = vadd.f32 %v973, %v981
      %v1038 = vadd.f32 %v1037, %v989
      %v1039 = vadd.f32 %v1038, %v997
      %v1040 = vrot.slane %v1039, 4
      %v1041 = vadd.f32 %v1039, %v1040
      %v1042 = vrot.slane %v1041, 2
      %v1043 = vadd.f32 %v1041, %v1042
      %v1044 = vrot.slane %v1043, 1
      %v1045 = vadd.f32 %v1043, %v1044
      %v1046 = vadd.f32 %v974, %v982
      %v1047 = vadd.f32 %v1046, %v990
      %v1048 = vadd.f32 %v1047, %v998
      %v1049 = vrot.slane %v1048, 4
      %v1050 = vadd.f32 %v1048, %v1049
      %v1051 = vrot.slane %v1050, 2
      %v1052 = vadd.f32 %v1050, %v1051
      %v1053 = vrot.slane %v1052, 1
      %v1054 = vadd.f32 %v1052, %v1053
      %v1055 = vadd.f32 %v975, %v983
      %v1056 = vadd.f32 %v1055, %v991
      %v1057 = vadd.f32 %v1056, %v999
      %v1058 = vrot.slane %v1057, 4
      %v1059 = vadd.f32 %v1057, %v1058
      %v1060 = vrot.slane %v1059, 2
      %v1061 = vadd.f32 %v1059, %v1060
      %v1062 = vrot.slane %v1061, 1
      %v1063 = vadd.f32 %v1061, %v1062
      %v1064 = vadd.f32 %v976, %v984
      %v1065 = vadd.f32 %v1064, %v992
      %v1066 = vadd.f32 %v1065, %v1000
      %v1067 = vrot.slane %v1066, 4
      %v1068 = vadd.f32 %v1066, %v1067
      %v1069 = vrot.slane %v1068, 2
      %v1070 = vadd.f32 %v1068, %v1069
      %v1071 = vrot.slane %v1070, 1
      %v1072 = vadd.f32 %v1070, %v1071
      %v1073 = vadd.f32 %v977, %v985
      %v1074 = vadd.f32 %v1073, %v993
      %v1075 = vadd.f32 %v1074, %v1001
      %v1076 = vrot.slane %v1075, 4
      %v1077 = vadd.f32 %v1075, %v1076
      %v1078 = vrot.slane %v1077, 2
      %v1079 = vadd.f32 %v1077, %v1078
      %v1080 = vrot.slane %v1079, 1
      %v1081 = vadd.f32 %v1079, %v1080
      %v1082 = vadd.f32 %v1002, %v1004
      %v1083 = vadd.f32 %v1082, %v1006
      %v1084 = vadd.f32 %v1083, %v1008
      %v1085 = vrot.slane %v1084, 4
      %v1086 = vadd.f32 %v1084, %v1085
      %v1087 = vrot.slane %v1086, 2
      %v1088 = vadd.f32 %v1086, %v1087
      %v1089 = vrot.slane %v1088, 1
      %v1090 = vadd.f32 %v1088, %v1089
      %v1091 = vadd.f32 %v1003, %v1005
      %v1092 = vadd.f32 %v1091, %v1007
      %v1093 = vadd.f32 %v1092, %v1009
      %v1094 = vrot.slane %v1093, 4
      %v1095 = vadd.f32 %v1093, %v1094
      %v1096 = vrot.slane %v1095, 2
      %v1097 = vadd.f32 %v1095, %v1096
      %v1098 = vrot.slane %v1097, 1
      %v1099 = vadd.f32 %v1097, %v1098
      %v1100 = vmul.f32 %v1018, 2.0
      %v1101 = vmul.f32 %v1027, 2.0
      %v1102 = vadd.f32 %v1100, %v1090
      %v1103 = vadd.f32 %v1101, %v1099
      %v1104 = vadd.f32 %v1102, %v1036
      %v1105 = vadd.f32 %v1103, %v1045
      %v1106 = vadd.f32 %v1104, %v1054
      %v1107 = vadd.f32 %v1105, %v1063
      %v1108 = vadd.f32 %v1106, %v1072
      %v1109 = vadd.f32 %v1107, %v1081
      %v1110 = vmul.f32 %v1108, 0.16666667
      %v1111 = vmul.f32 %v1109, 0.16666667
      %s1112 = sld [smem:[#allocation2]]
      %v1113 = vstv %s1112
      %v1114 = vadd.f32 %v1110, %v1113
      %v1115 = vadd.f32 %v1111, %v1113
      %v1116 = vsub.f32 0.0, %v1114
      %v1117 = vsub.f32 0.0, %v1115
      %v1118 = vmul.f32 %v1116, 1.442695
      %v1119 = vpow.pop %v1118
      %v1120 = vmul.f32 %v1117, 1.442695
      %v1121 = vpow.pop %v1120
      %v1122 = vadd.f32 %v1119, 1.0
      %v1123 = vadd.f32 %v1121, 1.0
      %v1124 = vrcp.pop %v1122
      %v1125 = vmul.f32 1.0, %v1124
      %v1126 = vrcp.pop %v1123
      %v1127 = vmul.f32 1.0, %v1126
      %v1130 = vcombine.low %v1125, %v1127
      %v1132 = vunpack.c.l.s4 1966171168
      %v1133 = vunpack.c.0.s8 %v1132
      %v1134 = vlaneseq
      %v1135 = vshrl.u32 %v1134, 7
      %v1136 = vsub.s32 %v1133, %v1135
      %v1137 = vrot.slane %v1130, %v1136
      %v1139 = vunpack.c.l.s4 1966171168
      %v1140 = vunpack.c.0.s8 %v1139
      %v1141 = vlaneseq
      %v1142 = vshrl.u32 %v1141, 7
      %v1143 = vsub.s32 %v1140, %v1142
      %v1144 = vrot.slane %v1137, %v1143
      %v1146 = vlaneseq
      %vm1147 = vcmp.ge.s32.totalorder %v1146, 0
      %vm1148 = vcmp.lt.s32.totalorder %v1146, 256
      %vm1149 = vmand %vm1147, %vm1148
      %1150 = vst.msk [vmem:[%s196] sm:$0x3] %vm1149, %v1144
      %p1151 = scmp.lt.s32.totalorder %s16, 1
      %s1152 = scalar_select %p1151, %s16, 1
      %s1153 = smul.addr %s1152, 2
      %s1154 = scalar_lea.vmem %s4, %s1153
      // Predicated region
      $region37: #{marine_debris_detector.1} parent=35 // pred_check
        %p1155 = pneg %p123
      $region38: #{marine_debris_detector.1} parent=35 // pred_check_branch
        %1157 = sbr.rel (%p1155) target = $region40
      $region39: #{marine_debris_detector.1} parent=35 // pred_region
        _
      $region40: #{marine_debris_detector.1} parent=35 // pred_fallthru
        _
    $region36: #{marine_debris_detector.1} parent=5 // pred_fallthru
      _
    %p1158 = scmp.le.s32.totalorder 2, %s11
    // Predicated region
    $region41: #{marine_debris_detector.1} parent=5 // pred_check
      %p1159 = pneg %p1158
    $region42: #{marine_debris_detector.1} parent=5 // pred_check_branch
      %1161 = sbr.rel (%p1159) target = $region44
    $region43: #{marine_debris_detector.1} parent=5 // pred_region
      %s1162 = ssub.s32 %s11, 2
      // Predicated region
      $region45: #{marine_debris_detector.1} parent=43 // pred_check
        %p1163 = pneg %p129
      $region46: #{marine_debris_detector.1} parent=43 // pred_check_branch
        %1165 = sbr.rel (%p1163) target = $region48
      $region47: #{marine_debris_detector.1} parent=43 // pred_region
        %p1166 = scmp.lt.s32.totalorder %s17, 1
        %s1167 = scalar_select %p1166, %s17, 1
        %s1168 = smul.addr %s1167, 2
        %s1169 = scalar_lea.vmem %s4, %s1168
      $region48: #{marine_debris_detector.1} parent=43 // pred_fallthru
        _
    $region44: #{marine_debris_detector.1} parent=5 // pred_fallthru
      _
  $region6: #{marine_debris_detector.1} parent=0 // loop_footer
    %s15 = sadd.s32 1, %s11
  $region7: #{marine_debris_detector.1} parent=0 // loop_footer_branch
    %10 = sbr.rel target = $region3
  $region8: #{marine_debris_detector.1} parent=0 // loop_exit
    _

</llo_original>
